<compile_context>
chip_gen: v5e
topology: v5e:2x2
jax: 0.10.0
libtpu: 0.0.40
codegen_flags: <defaults>
</compile_context>

<pallas_src>
import functools

import jax
import jax.numpy as jnp
from jax.experimental import pallas as pl
from jax.experimental.pallas import tpu as pltpu

_LANE = 128  # TPU lane width (used only for the lane-dense partial-loss output)


def _round_up(x, m):
    return (x + m - 1) // m * m


def _distill_kl_kernel(*refs, inv_T, scale_d, scale_ce, b_total, block_b,
                       weighted, use_distill, use_ce, t_is_one, mask_rows):
    """One batch tile -> one scaled partial loss, broadcast into a lane-dense block."""
    if weighted:
        ys_ref, yt_ref, labels_ref, cw_ref, out_ref = refs
    else:
        ys_ref, yt_ref, labels_ref, out_ref = refs

    ys = ys_ref[...].astype(jnp.float32)                      # [TB, C] student logits
    TB, C = ys.shape
    col = jax.lax.broadcasted_iota(jnp.int32, (TB, C), 1)

    if mask_rows:
        # Rows past the true batch size hold stale/garbage VMEM data (no HBM padding
        # was done).  All reductions below are per-row, so zeroing the per-row results
        # with this mask is sufficient (even if the garbage produces NaN/Inf).
        row = (jax.lax.broadcasted_iota(jnp.int32, (TB, 1), 0)
               + pl.program_id(0) * block_b)
        row_valid = row < b_total                              # [TB, 1] bool

    partial = jnp.float32(0.0)
    ms = log_ss = None

    if use_distill:
        yt = yt_ref[...].astype(jnp.float32)                   # [TB, C] teacher logits
        zs = ys if t_is_one else ys * inv_T
        zt = yt if t_is_one else yt * inv_T

        ms = jnp.max(zs, axis=-1, keepdims=True)               # student/T softmax stats
        ss = jnp.sum(jnp.exp(zs - ms), axis=-1, keepdims=True)
        log_ss = jnp.log(ss)

        mt = jnp.max(zt, axis=-1, keepdims=True)               # teacher/T softmax stats
        et = jnp.exp(zt - mt)                                  # [TB, C]
        st = jnp.sum(et, axis=-1, keepdims=True)               # [TB, 1]

        # Row-wise KL without materializing p_t:
        #   sum_c p_t*(logp_t - logp_s) = [sum_c et*(zt-zs)] / st + (ms-mt) + (log ss - log st)
        kl_num = jnp.sum(et * (zt - zs), axis=-1, keepdims=True)
        row_const = (ms - mt) + (log_ss - jnp.log(st))
        # Exact reciprocal on a [TB,1] vector is negligible either way; keeps f32
        # results within ~1e-6 of the reference.
        row_kl = kl_num * pl.reciprocal(st, approx=False) + row_const

        if weighted:
            # per-sample weight = class_weights[argmax(y_t, dim=1)] ("first max", like
            # torch).  Reuses mt: argmax(zt) == argmax(yt) since T > 0 (exact-float
            # ties after scaling are the only edge case).
            cw = cw_ref[...].astype(jnp.float32)               # [1, C]
            pred_t = jnp.min(jnp.where(zt == mt, col, C), axis=-1, keepdims=True)
            w = jnp.sum(jnp.where(col == pred_t, cw, 0.0), axis=-1, keepdims=True)
            row_kl = row_kl * w

        if mask_rows:
            row_kl = jnp.where(row_valid, row_kl, 0.0)
        partial = partial + scale_d * jnp.sum(row_kl)          # alpha*T^2/B folded in

    if use_ce:
        labels = labels_ref[...]                               # [TB, 1] int32
        if t_is_one and use_distill:
            m0, lse0 = ms, log_ss                              # zs == ys when T == 1
        else:
            m0 = jnp.max(ys, axis=-1, keepdims=True)
            lse0 = jnp.log(jnp.sum(jnp.exp(ys - m0), axis=-1, keepdims=True))
        picked = jnp.sum(jnp.where(col == labels, ys, 0.0), axis=-1, keepdims=True)
        row_ce = (m0 + lse0) - picked
        if mask_rows:
            row_ce = jnp.where(row_valid, row_ce, 0.0)
        partial = partial + scale_ce * jnp.sum(row_ce)         # (1-alpha)/B folded in

    out_ref[...] = jnp.full(out_ref.shape, partial, dtype=jnp.float32)


def distill_kl_loss(y_s, y_t, labels, class_weights=None, *, T=4.0, alpha=0.5,
                    block_b=None):
    """Total DistillKL loss (scalar). Accepts f32 or bf16 logits (f32 math in-kernel)."""
    y_s = jnp.asarray(y_s)
    y_t = jnp.asarray(y_t)
    B, C = y_s.shape
    itemsize = jnp.dtype(y_s.dtype).itemsize
    sub = 16 if itemsize == 2 else 8            # sublane granularity (bf16 vs f32)

    # Batch tile: ~2 MiB of f32 working tile per logit input per step (auto
    # double-buffered), up to 4096 rows.  No class padding: class block is full C.
    if block_b is None:
        tb = (2 * 1024 * 1024) // (C * 4)
        tb = min(4096, max(sub, (tb // sub) * sub))
    else:
        tb = max(sub, _round_up(int(block_b), sub))
    tb = min(tb, _round_up(B, sub))
    # Guarantee >= 2 grid tiles so both TensorCores get work on v7x (near-free on 1-TC parts).
    if tb >= B and B > sub:
        tb = max(sub, _round_up(-(-B // 2), sub))
    num_tiles = pl.cdiv(B, tb)
    mask_rows = (num_tiles * tb != B)           # in-kernel row mask replaces batch padding
    # TODO(synk): for vocab-scale C where a [tb, C] f32 tile no longer fits VMEM, add a
    # second "arbitrary" grid axis over classes with online-softmax running max/sum.

    labels2d = jnp.asarray(labels, jnp.int32).reshape(B, 1)

    weighted = class_weights is not None
    use_distill = float(alpha) != 0.0
    use_ce = float(alpha) != 1.0
    t_is_one = float(T) == 1.0

    scale_d = float(alpha) * float(T) * float(T) / B
    scale_ce = (1.0 - float(alpha)) / B

    kernel = functools.partial(
        _distill_kl_kernel, inv_T=1.0 / float(T), scale_d=scale_d, scale_ce=scale_ce,
        b_total=B, block_b=tb, weighted=weighted, use_distill=use_distill,
        use_ce=use_ce, t_is_one=t_is_one, mask_rows=mask_rows)

    in_specs = [
        pl.BlockSpec((tb, C), lambda i: (i, 0)),    # y_s tile (no padded copy in HBM)
        pl.BlockSpec((tb, C), lambda i: (i, 0)),    # y_t tile
        pl.BlockSpec((tb, 1), lambda i: (i, 0)),    # labels
    ]
    operands = [y_s, y_t, labels2d]
    if weighted:
        cw = jnp.asarray(class_weights, jnp.float32).reshape(1, C)
        in_specs.append(pl.BlockSpec((1, C), lambda i: (0, 0)))   # resident weights
        operands.append(cw)

    n_exp = (2 if use_distill else 0) + \
            ((0 if (t_is_one and use_distill) else 1) if use_ce else 0)
    cost = pl.CostEstimate(
        flops=int((10 * int(use_distill) + 5 * int(use_ce) + 4 * int(weighted)) * B * C),
        transcendentals=int(n_exp * B * C),
        bytes_accessed=int(2 * B * C * itemsize + B * 4 + C * 4
                           + num_tiles * 8 * _LANE * 4),
    )

    partials = pl.pallas_call(
        kernel,
        out_shape=jax.ShapeDtypeStruct((num_tiles, 8, _LANE), jnp.float32),
        grid_spec=pltpu.PrefetchScalarGridSpec(
            num_scalar_prefetch=0,
            grid=(num_tiles,),
            in_specs=in_specs,
            out_specs=pl.BlockSpec((1, 8, _LANE), lambda i: (i, 0, 0)),  # lane-dense
        ),
        compiler_params=pltpu.CompilerParams(
            dimension_semantics=("parallel",),      # independent tiles -> both TCs on v7x
            vmem_limit_bytes=48 * 1024 * 1024,      # headroom on v7x's 64 MiB VMEM
        ),
        cost_estimate=cost,
    )(*operands)

    # Tiny [num_tiles] reduction (partials are already alpha/T^2/B scaled).
    return jnp.sum(partials[:, 0, 0])


def _reference(y_s, y_t, labels, class_weights, T, alpha):
    """Pure-JAX reference mirroring the PyTorch forward (f32 math)."""
    y_s = jnp.asarray(y_s, jnp.float32)
    y_t = jnp.asarray(y_t, jnp.float32)
    B, C = y_s.shape
    logp_s = jax.nn.log_softmax(y_s / T, axis=1)
    p_t = jax.nn.softmax(y_t / T, axis=1)
    logp_t = jax.nn.log_softmax(y_t / T, axis=1)
    kl = p_t * (logp_t - logp_s)
    if class_weights is not None:
        preds_t = jnp.argmax(y_t, axis=1)
        w = jnp.asarray(class_weights, jnp.float32)[preds_t][:, None]
        distill = jnp.sum(kl * w) * T ** 2 / B
    else:
        distill = jnp.sum(kl) * T ** 2 / B
    logp0 = jax.nn.log_softmax(y_s, axis=1)
    ce = -jnp.mean(logp0[jnp.arange(B), labels])
    return alpha * distill + (1 - alpha) * ce


if __name__ == "__main__":
    T, alpha = 4.0, 0.5

    # --- case 1: tiny, single/dual-tile, weighted + unweighted paths (B=8, C=16) ---
    k1, k2, k3, k4 = jax.random.split(jax.random.PRNGKey(0), 4)
    B, C = 8, 16
    y_s = jax.random.normal(k1, (B, C), jnp.float32) * 2.0
    y_t = jax.random.normal(k2, (B, C), jnp.float32) * 2.0
    labels = jax.random.randint(k3, (B,), 0, C, jnp.int32)
    cwts = jax.random.uniform(k4, (C,), jnp.float32, 0.5, 1.5)

    out_w = jax.block_until_ready(distill_kl_loss(y_s, y_t, labels, cwts, T=T, alpha=alpha))
    ref_w = _reference(y_s, y_t, labels, cwts, T, alpha)
    assert jnp.allclose(out_w, ref_w, rtol=1e-5, atol=1e-5), (out_w, ref_w)

    out_u = jax.block_until_ready(distill_kl_loss(y_s, y_t, labels, None, T=T, alpha=alpha))
    ref_u = _reference(y_s, y_t, labels, None, T, alpha)
    assert jnp.allclose(out_u, ref_u, rtol=1e-5, atol=1e-5), (out_u, ref_u)

    # --- case 2: multi-tile grid + batch-remainder masking (B=40, tb=16, C=20) ---
    k1, k2, k3, k4 = jax.random.split(jax.random.PRNGKey(1), 4)
    B2, C2 = 40, 20
    y_s2 = jax.random.normal(k1, (B2, C2), jnp.float32) * 3.0
    y_t2 = jax.random.normal(k2, (B2, C2), jnp.float32) * 3.0
    labels2 = jax.random.randint(k3, (B2,), 0, C2, jnp.int32)
    cwts2 = jax.random.uniform(k4, (C2,), jnp.float32, 0.5, 1.5)
    out_t = jax.block_until_ready(
        distill_kl_loss(y_s2, y_t2, labels2, cwts2, T=T, alpha=alpha, block_b=16))
    ref_t = _reference(y_s2, y_t2, labels2, cwts2, T, alpha)
    assert jnp.allclose(out_t, ref_t, rtol=1e-5, atol=1e-5), (out_t, ref_t)

    # --- case 3: bf16 logits (halved HBM traffic); kernel upcasts to f32 in VMEM ---
    out_b = jax.block_until_ready(
        distill_kl_loss(y_s2.astype(jnp.bfloat16), y_t2.astype(jnp.bfloat16),
                        labels2, cwts2, T=T, alpha=alpha, block_b=16))
    ref_b = _reference(y_s2.astype(jnp.bfloat16), y_t2.astype(jnp.bfloat16),
                       labels2, cwts2, T, alpha)
    assert jnp.allclose(out_b, ref_b, rtol=1e-4, atol=1e-4), (out_b, ref_b)

    # --- case 4: T == 1 specialization (CE reuses distill softmax stats) + remainder ---
    k1, k2, k3 = jax.random.split(jax.random.PRNGKey(2), 3)
    B3, C3 = 24, 20
    y_s3 = jax.random.normal(k1, (B3, C3), jnp.float32) * 2.0
    y_t3 = jax.random.normal(k2, (B3, C3), jnp.float32) * 2.0
    labels3 = jax.random.randint(k3, (B3,), 0, C3, jnp.int32)
    out_1 = jax.block_until_ready(distill_kl_loss(y_s3, y_t3, labels3, None, T=1.0, alpha=0.7))
    ref_1 = _reference(y_s3, y_t3, labels3, None, 1.0, 0.7)
    assert jnp.allclose(out_1, ref_1, rtol=1e-5, atol=1e-5), (out_1, ref_1)

    # --- case 5: alpha == 1.0 (distill-only) and alpha == 0.0 (CE-only) specializations ---
    out_a1 = jax.block_until_ready(distill_kl_loss(y_s3, y_t3, labels3, None, T=T, alpha=1.0))
    ref_a1 = _reference(y_s3, y_t3, labels3, None, T, 1.0)
    assert jnp.allclose(out_a1, ref_a1, rtol=1e-5, atol=1e-5), (out_a1, ref_a1)
    out_a0 = jax.block_until_ready(distill_kl_loss(y_s3, y_t3, labels3, None, T=T, alpha=0.0))
    ref_a0 = _reference(y_s3, y_t3, labels3, None, T, 0.0)
    assert jnp.allclose(out_a0, ref_a0, rtol=1e-5, atol=1e-5), (out_a0, ref_a0)

    print("KERNEL_OK")
</pallas_src>

<mosaic_0001>
module attributes {stable_mosaic.version = 11 : i64} {
  func.func @_distill_kl_kernel(%arg0: i32, %arg1: memref<8x16xf32, #tpu.memory_space<vmem>>, %arg2: memref<8x16xf32, #tpu.memory_space<vmem>>, %arg3: memref<8x1xi32, #tpu.memory_space<vmem>>, %arg4: memref<1x16xf32, #tpu.memory_space<vmem>>, %arg5: memref<1x8x128xf32, #tpu.memory_space<vmem>>) attributes {dimension_semantics = [#tpu.dimension_semantics<parallel>], iteration_bounds = array<i64: 1>, scalar_prefetch = 0 : i64, scratch_operands = 0 : i64, tpu.core_type = #tpu.core_type<tc>, window_params = [{transform_indices = @transform_0, window_bounds = array<i64: 8, 16>}, {transform_indices = @transform_1, window_bounds = array<i64: 8, 16>}, {transform_indices = @transform_2, window_bounds = array<i64: 8, 1>}, {pipeline_mode = #tpu.pipeline_mode<synchronous>, transform_indices = @transform_3, window_bounds = array<i64: 1, 16>}, {transform_indices = @transform_4, window_bounds = array<i64: 1, 8, 128>}]} {
    %c0 = arith.constant 0 : index
    %c0_0 = arith.constant 0 : index
    %0 = vector.load %arg1[%c0, %c0_0] : memref<8x16xf32, #tpu.memory_space<vmem>>, vector<8x16xf32>
    %1 = tpu.iota {dimensions = array<i32: 1>} : vector<8x16xi32>
    %c0_1 = arith.constant 0 : index
    %c0_2 = arith.constant 0 : index
    %2 = vector.load %arg2[%c0_1, %c0_2] : memref<8x16xf32, #tpu.memory_space<vmem>>, vector<8x16xf32>
    %cst = arith.constant 2.500000e-01 : f32
    %3 = vector.broadcast %cst : f32 to vector<8x16xf32>
    %4 = arith.mulf %0, %3 : vector<8x16xf32>
    %cst_3 = arith.constant 2.500000e-01 : f32
    %5 = vector.broadcast %cst_3 : f32 to vector<8x16xf32>
    %6 = arith.mulf %2, %5 : vector<8x16xf32>
    %cst_4 = arith.constant dense<0xFF800000> : vector<8xf32>
    %7 = vector.multi_reduction <maximumf>, %4, %cst_4 [1] : vector<8x16xf32> to vector<8xf32>
    %8 = vector.shape_cast %7 : vector<8xf32> to vector<8x1xf32>
    %9 = vector.broadcast %8 : vector<8x1xf32> to vector<8x16xf32>
    %10 = arith.subf %4, %9 : vector<8x16xf32>
    %11 = math.exp %10 : vector<8x16xf32>
    %cst_5 = arith.constant dense<0.000000e+00> : vector<8xf32>
    %12 = vector.multi_reduction <add>, %11, %cst_5 [1] : vector<8x16xf32> to vector<8xf32>
    %13 = vector.shape_cast %12 : vector<8xf32> to vector<8x1xf32>
    %14 = math.log %13 : vector<8x1xf32>
    %cst_6 = arith.constant dense<0xFF800000> : vector<8xf32>
    %15 = vector.multi_reduction <maximumf>, %6, %cst_6 [1] : vector<8x16xf32> to vector<8xf32>
    %16 = vector.shape_cast %15 : vector<8xf32> to vector<8x1xf32>
    %17 = vector.broadcast %16 : vector<8x1xf32> to vector<8x16xf32>
    %18 = arith.subf %6, %17 : vector<8x16xf32>
    %19 = math.exp %18 : vector<8x16xf32>
    %cst_7 = arith.constant dense<0.000000e+00> : vector<8xf32>
    %20 = vector.multi_reduction <add>, %19, %cst_7 [1] : vector<8x16xf32> to vector<8xf32>
    %21 = vector.shape_cast %20 : vector<8xf32> to vector<8x1xf32>
    %22 = arith.subf %6, %4 : vector<8x16xf32>
    %23 = arith.mulf %19, %22 : vector<8x16xf32>
    %cst_8 = arith.constant dense<0.000000e+00> : vector<8xf32>
    %24 = vector.multi_reduction <add>, %23, %cst_8 [1] : vector<8x16xf32> to vector<8xf32>
    %25 = vector.shape_cast %24 : vector<8xf32> to vector<8x1xf32>
    %26 = arith.subf %8, %16 : vector<8x1xf32>
    %27 = math.log %21 : vector<8x1xf32>
    %28 = arith.subf %14, %27 : vector<8x1xf32>
    %29 = arith.addf %26, %28 : vector<8x1xf32>
    %30 = tpu.reciprocal %21 : vector<8x1xf32> -> vector<8x1xf32>
    %31 = arith.mulf %25, %30 : vector<8x1xf32>
    %32 = arith.addf %31, %29 : vector<8x1xf32>
    %c0_9 = arith.constant 0 : index
    %c0_10 = arith.constant 0 : index
    %33 = vector.load %arg4[%c0_9, %c0_10] : memref<1x16xf32, #tpu.memory_space<vmem>>, vector<1x16xf32>
    %34 = vector.broadcast %16 : vector<8x1xf32> to vector<8x16xf32>
    %35 = arith.cmpf oeq, %6, %34 : vector<8x16xf32>
    %c16_i32 = arith.constant 16 : i32
    %36 = vector.broadcast %c16_i32 : i32 to vector<8x16xi32>
    %37 = arith.select %35, %1, %36 : vector<8x16xi1>, vector<8x16xi32>
    %cst_11 = arith.constant dense<2147483647> : vector<8xi32>
    %38 = vector.multi_reduction <minsi>, %37, %cst_11 [1] : vector<8x16xi32> to vector<8xi32>
    %39 = vector.shape_cast %38 : vector<8xi32> to vector<8x1xi32>
    %40 = vector.broadcast %39 : vector<8x1xi32> to vector<8x16xi32>
    %41 = arith.cmpi eq, %1, %40 : vector<8x16xi32>
    %cst_12 = arith.constant 0.000000e+00 : f32
    %42 = vector.shape_cast %33 : vector<1x16xf32> to vector<1x16xf32>
    %43 = vector.broadcast %42 : vector<1x16xf32> to vector<8x16xf32>
    %44 = vector.broadcast %cst_12 : f32 to vector<8x16xf32>
    %45 = arith.select %41, %43, %44 : vector<8x16xi1>, vector<8x16xf32>
    %cst_13 = arith.constant dense<0.000000e+00> : vector<8xf32>
    %46 = vector.multi_reduction <add>, %45, %cst_13 [1] : vector<8x16xf32> to vector<8xf32>
    %47 = vector.shape_cast %46 : vector<8xf32> to vector<8x1xf32>
    %48 = arith.mulf %32, %47 : vector<8x1xf32>
    %49 = vector.shape_cast %48 : vector<8x1xf32> to vector<1x8x1xf32>
    %cst_14 = arith.constant dense<0.000000e+00> : vector<1xf32>
    %50 = vector.multi_reduction <add>, %49, %cst_14 [1, 2] : vector<1x8x1xf32> to vector<1xf32>
    %51 = vector.shape_cast %50 : vector<1xf32> to vector<1x1x1xf32>
    %52 = vector.extract %51[0, 0, 0] : f32 from vector<1x1x1xf32>
    %cst_15 = arith.constant 1.000000e+00 : f32
    %53 = arith.mulf %cst_15, %52 : f32
    %cst_16 = arith.constant 0.000000e+00 : f32
    %54 = arith.addf %cst_16, %53 : f32
    %c0_17 = arith.constant 0 : index
    %c0_18 = arith.constant 0 : index
    %55 = vector.load %arg3[%c0_17, %c0_18] : memref<8x1xi32, #tpu.memory_space<vmem>>, vector<8x1xi32>
    %cst_19 = arith.constant dense<0xFF800000> : vector<8xf32>
    %56 = vector.multi_reduction <maximumf>, %0, %cst_19 [1] : vector<8x16xf32> to vector<8xf32>
    %57 = vector.shape_cast %56 : vector<8xf32> to vector<8x1xf32>
    %58 = vector.broadcast %57 : vector<8x1xf32> to vector<8x16xf32>
    %59 = arith.subf %0, %58 : vector<8x16xf32>
    %60 = math.exp %59 : vector<8x16xf32>
    %cst_20 = arith.constant dense<0.000000e+00> : vector<8xf32>
    %61 = vector.multi_reduction <add>, %60, %cst_20 [1] : vector<8x16xf32> to vector<8xf32>
    %62 = vector.shape_cast %61 : vector<8xf32> to vector<8x1xf32>
    %63 = math.log %62 : vector<8x1xf32>
    %64 = vector.broadcast %55 : vector<8x1xi32> to vector<8x16xi32>
    %65 = arith.cmpi eq, %1, %64 : vector<8x16xi32>
    %cst_21 = arith.constant 0.000000e+00 : f32
    %66 = vector.broadcast %cst_21 : f32 to vector<8x16xf32>
    %67 = arith.select %65, %0, %66 : vector<8x16xi1>, vector<8x16xf32>
    %cst_22 = arith.constant dense<0.000000e+00> : vector<8xf32>
    %68 = vector.multi_reduction <add>, %67, %cst_22 [1] : vector<8x16xf32> to vector<8xf32>
    %69 = vector.shape_cast %68 : vector<8xf32> to vector<8x1xf32>
    %70 = arith.addf %57, %63 : vector<8x1xf32>
    %71 = arith.subf %70, %69 : vector<8x1xf32>
    %72 = vector.shape_cast %71 : vector<8x1xf32> to vector<1x8x1xf32>
    %cst_23 = arith.constant dense<0.000000e+00> : vector<1xf32>
    %73 = vector.multi_reduction <add>, %72, %cst_23 [1, 2] : vector<1x8x1xf32> to vector<1xf32>
    %74 = vector.shape_cast %73 : vector<1xf32> to vector<1x1x1xf32>
    %75 = vector.extract %74[0, 0, 0] : f32 from vector<1x1x1xf32>
    %cst_24 = arith.constant 6.250000e-02 : f32
    %76 = arith.mulf %cst_24, %75 : f32
    %77 = arith.addf %54, %76 : f32
    %78 = vector.broadcast %77 : f32 to vector<1x8x128xf32>
    %c0_25 = arith.constant 0 : index
    %c0_26 = arith.constant 0 : index
    %c0_27 = arith.constant 0 : index
    %79 = vector.load %arg5[%c0_25, %c0_26, %c0_27] : memref<1x8x128xf32, #tpu.memory_space<vmem>>, vector<1x8x128xf32>
    tpu.vector_store %arg5[%c0_25, %c0_26, %c0_27], %78 {strides = array<i32>} : memref<1x8x128xf32, #tpu.memory_space<vmem>>, vector<1x8x128xf32>,
    return
  }
  func.func @transform_0(%arg0: i32) -> (i32, i32) {
    %c0_i32 = arith.constant 0 : i32
    %c0_i32_0 = arith.constant 0 : i32
    return %arg0, %c0_i32 : i32, i32
  }
  func.func @transform_1(%arg0: i32) -> (i32, i32) {
    %c0_i32 = arith.constant 0 : i32
    %c0_i32_0 = arith.constant 0 : i32
    return %arg0, %c0_i32 : i32, i32
  }
  func.func @transform_2(%arg0: i32) -> (i32, i32) {
    %c0_i32 = arith.constant 0 : i32
    %c0_i32_0 = arith.constant 0 : i32
    return %arg0, %c0_i32 : i32, i32
  }
  func.func @transform_3(%arg0: i32) -> (i32, i32) {
    %c0_i32 = arith.constant 0 : i32
    %c0_i32_0 = arith.constant 0 : i32
    %c0_i32_1 = arith.constant 0 : i32
    return %c0_i32, %c0_i32_0 : i32, i32
  }
  func.func @transform_4(%arg0: i32) -> (i32, i32, i32) {
    %c0_i32 = arith.constant 0 : i32
    %c0_i32_0 = arith.constant 0 : i32
    %c0_i32_1 = arith.constant 0 : i32
    return %arg0, %c0_i32, %c0_i32_0 : i32, i32, i32
  }
}

</mosaic_0001>

<llo_original>
// kernel: tpu_custom_call.1
$region0: #{tpu_custom_call.1}
  #allocation0 [shape = 'u32[]', space=smem, size = 0x4, offset = 0x4, fixed_abs, tag = 'smem constant byte address 0x4 - core index']
  #allocation1 [shape = 'u32[72,128]{1,0:T(1,128)}', space=vmem, size = 0x9000, scoped, tag = 'internal scratch']
  %s0 = inlined_call_operand.vmem [shape: f32[8,16], index: 0, kind: input, shape index: {}]
  %s1 = inlined_call_operand.hbm [shape: f32[8,16], index: 1, kind: input, shape index: {}]
  %s2 = inlined_call_operand.vmem [shape: s32[8,1], index: 2, kind: input, shape index: {}]
  %s3 = inlined_call_operand.vmem [shape: f32[1,16], index: 3, kind: input, shape index: {}]
  %s4 = inlined_call_operand.hbm [shape: f32[1,8,128], index: 4, kind: output, shape index: {}]
  %s5 = sld [smem:[#allocation0]]
  $region30: #{tpu_custom_call.1} parent=0
    _
  %s7 = ssub.s32 1, %s5
  %s8 = scalar_select 0, %s7, %s5
  $region1: #{tpu_custom_call.1} parent=0
    #allocation2 [shape = 'u8[4096]{0}', space=vmem, size = 0x1000, scoped, tag = 'input window, operand 1, single buffered']
    #allocation3 [shape = 's32[1]{0}', space=sflag, size = 0x4, scoped, tag = 'scoped memory for tpu_custom_call.1']
    #allocation4 [shape = 's32[1]{0}', space=sflag, size = 0x4, scoped, tag = 'scoped memory for tpu_custom_call.1']
    #allocation5 [shape = 'u8[4096]{0}', space=vmem, size = 0x1000, scoped, tag = 'output window, operand 0, single buffered']
    %9 = vsyncpa [#allocation3], 0
    %10 = vsyncpa [#allocation4], 0
    // Predicated region
    $region2: #{tpu_custom_call.1} parent=1 // pred_check
      _
    $region3: #{tpu_custom_call.1} parent=1 // pred_check_branch
      %12 = sbr.rel (0) target = $region5
    $region4: #{tpu_custom_call.1} parent=1 // pred_region
      _
    $region5: #{tpu_custom_call.1} parent=1 // pred_fallthru
      _
    // Predicated region
    $region6: #{tpu_custom_call.1} parent=1 // pred_check
      _
    $region7: #{tpu_custom_call.1} parent=1 // pred_check_branch
      %14 = sbr.rel (0) target = $region9
    $region8: #{tpu_custom_call.1} parent=1 // pred_region
      %16 = vsyncadd [#allocation3], 0
      %s18 = sshll.u32 %s1, 4
      %s19 = int_to_ptr.hbm [resolvable:$true] %s18
      %s20 = sshll.u32 [#allocation2], 4
      %s21 = int_to_ptr.vmem [resolvable:$true] %s20
      %23 = dma.hbm_to_vmem [thread:$0]  %s19, 128, %s21, [#allocation3]
    $region9: #{tpu_custom_call.1} parent=1 // pred_fallthru
      _
    // Predicated region
    $region10: #{tpu_custom_call.1} parent=1 // pred_check
      _
    $region11: #{tpu_custom_call.1} parent=1 // pred_check_branch
      %25 = sbr.rel (0) target = $region13
    $region12: #{tpu_custom_call.1} parent=1 // pred_region
      _
    $region13: #{tpu_custom_call.1} parent=1 // pred_fallthru
      _
    // Predicated region
    $region14: #{tpu_custom_call.1} parent=1 // pred_check
      _
    $region15: #{tpu_custom_call.1} parent=1 // pred_check_branch
      %27 = sbr.rel (0) target = $region17
    $region16: #{tpu_custom_call.1} parent=1 // pred_region
      _
    $region17: #{tpu_custom_call.1} parent=1 // pred_fallthru
      _
    // Predicated region
    $region18: #{tpu_custom_call.1} parent=1 // pred_check
      _
    $region19: #{tpu_custom_call.1} parent=1 // pred_check_branch
      %29 = sbr.rel (0) target = $region21
    $region20: #{tpu_custom_call.1} parent=1 // pred_region
      %31 = dma.done [#allocation3], 128
    $region21: #{tpu_custom_call.1} parent=1 // pred_fallthru
      _
    %v32 = vld [vmem:[%s0] sm:$0xff]
    %v33 = vlaneseq
    %v34 = vand.u32 %v33, 127
    %v35 = vld [vmem:[#allocation2] sm:$0xff]
    %v36 = vmul.f32 %v32, 0.25
    %v37 = vmul.f32 %v35, 0.25
    %vm38 = vcmask 130048
    %v39 = vsel %vm38, %v36, -inf
    %40 = vmax.xlane.f32.xlu0 %v39
    %v41 = vpop.xlane.xlu0 %40
    %v42 = vsub.f32 %v36, %v41
    %v43 = vmul.f32 %v42, 1.442695
    %v44 = vpow.pop %v43
    %v45 = vsel %vm38, %v44, 0.0
    %46 = vadd.xlane.f32.xlu0 %v45
    %v47 = vpop.xlane.xlu0 %46
    %v48 = vlog2.pop %v47
    %v49 = vmul.f32 %v48, 0.6931472
    %v50 = vsel %vm38, %v37, -inf
    %51 = vmax.xlane.f32.xlu0 %v50
    %v52 = vpop.xlane.xlu0 %51
    %v53 = vsub.f32 %v37, %v52
    %v54 = vmul.f32 %v53, 1.442695
    %v55 = vpow.pop %v54
    %v56 = vsel %vm38, %v55, 0.0
    %57 = vadd.xlane.f32.xlu0 %v56
    %v58 = vpop.xlane.xlu0 %57
    %v59 = vsub.f32 %v37, %v36
    %v60 = vmul.f32 %v55, %v59
    %v61 = vsel %vm38, %v60, 0.0
    %62 = vadd.xlane.f32.xlu0 %v61
    %v63 = vpop.xlane.xlu0 %62
    %v64 = vsub.f32 %v41, %v52
    %v65 = vlog2.pop %v58
    %v66 = vmul.f32 %v65, 0.6931472
    %v67 = vsub.f32 %v49, %v66
    %v68 = vadd.f32 %v64, %v67
    %v69 = vrcp.pop %v58
    %v70 = vmul.f32 %v58, %v69
    %v71 = vsub.f32 1.0, %v70
    %v72 = vmul.f32 %v69, %v71
    %v73 = vadd.f32 %v69, %v72
    %vm74 = vweird.f32 %v58
    %vm75 = vweird.f32 %v69
    %vm76 = vmor %vm74, %vm75
    %v77 = vsel %vm76, %v69, %v73
    %v78 = vand.u32 2147483647, %v58
    %vm79 = vcmp.eq.f32.partialorder %v78, 8.507059e+37
    %v80 = vand.u32 %v58, 2147483648
    %v81 = vor.u32 1.1754944e-38, %v80
    %v82 = vsel %vm79, %v81, %v77
    %v83 = vmul.f32 %v63, %v82
    %v84 = vadd.f32 %v83, %v68
    %v85 = vld [vmem:[%s3] sm:$0x1]
    %vm86 = vcmp.eq.f32.partialorder %v37, %v52
    %v87 = vsel %vm86, %v34, 16
    %v88 = vsel %vm38, %v87, 2147483647
    %v89 = vand.u32 %v88, 65535
    %v90 = vshra.s32 %v88, 16
    %v91 = vcvt.s32.f32 %v89
    %v92 = vcvt.s32.f32 %v90
    %93 = vmin.xlane.f32.xlu0 %v92
    %v94 = vpop.xlane.xlu0 %93
    %vm95 = vcmp.eq.f32.partialorder %v92, %v94
    %v96 = vsel %vm95, %v91, inf
    %97 = vmin.xlane.f32.xlu0 %v96
    %v98 = vpop.xlane.xlu0 %97
    %v99 = vcvt.f32.s32 %v98
    %v100 = vcvt.f32.s32 %v94
    %v101 = vshll.u32 %v100, 16
    %v102 = vadd.s32 %v101, %v99
    %vm103 = vcmp.eq.s32.totalorder %v34, %v102
    %v105 = vperm.slane %v85, 0
    %v107 = vsel %vm103, %v105, 0.0
    %v108 = vsel %vm38, %v107, 0.0
    %109 = vadd.xlane.f32.xlu0 %v108
    %v110 = vpop.xlane.xlu0 %109
    %v111 = vmul.f32 %v84, %v110
    %vm112 = vcmask 7168
    %v113 = vsel %vm112, %v111, 0.0
    %114 = vadd.xlane.f32.xlu0 %v113
    %v115 = vpop.xlane.xlu0 %114
    %v116 = vrot.slane %v115, 4
    %v117 = vadd.f32 %v115, %v116
    %v118 = vrot.slane %v117, 2
    %v119 = vadd.f32 %v117, %v118
    %v120 = vrot.slane %v119, 1
    %v121 = vadd.f32 %v119, %v120
    %s122 = vtos %v121
    %s123 = sadd.f32 %s122, 0.0
    %v124 = vld [vmem:[%s2] sm:$0xff]
    %v125 = vsel %vm38, %v32, -inf
    %126 = vmax.xlane.f32.xlu0 %v125
    %v127 = vpop.xlane.xlu0 %126
    %v128 = vsub.f32 %v32, %v127
    %v129 = vmul.f32 %v128, 1.442695
    %v130 = vpow.pop %v129
    %v131 = vsel %vm38, %v130, 0.0
    %132 = vadd.xlane.f32.xlu0 %v131
    %v133 = vpop.xlane.xlu0 %132
    %v134 = vlog2.pop %v133
    %v135 = vmul.f32 %v134, 0.6931472
    %136 = vset.pattern.permute.xlu0 0
    %137 = vperm.xlu0 %136, %v124
    %v138 = vpop.permute.xlu0 %137
    %vm139 = vcmp.eq.s32.totalorder %v34, %v138
    %v140 = vsel %vm139, %v32, 0.0
    %v141 = vsel %vm38, %v140, 0.0
    %142 = vadd.xlane.f32.xlu0 %v141
    %v143 = vpop.xlane.xlu0 %142
    %v144 = vadd.f32 %v127, %v135
    %v145 = vsub.f32 %v144, %v143
    %v146 = vsel %vm112, %v145, 0.0
    %147 = vadd.xlane.f32.xlu0 %v146
    %v148 = vpop.xlane.xlu0 %147
    %v149 = vrot.slane %v148, 4
    %v150 = vadd.f32 %v148, %v149
    %v151 = vrot.slane %v150, 2
    %v152 = vadd.f32 %v150, %v151
    %v153 = vrot.slane %v152, 1
    %v154 = vadd.f32 %v152, %v153
    %s155 = vtos %v154
    %s156 = smul.f32 %s155, 0.0625
    %s157 = sadd.f32 %s123, %s156
    %v158 = vstv %s157
    %159 = vst [vmem:[#allocation5] sm:$0xff] %v158
    // Predicated region
    $region22: #{tpu_custom_call.1} parent=1 // pred_check
      _
    $region23: #{tpu_custom_call.1} parent=1 // pred_check_branch
      %161 = sbr.rel (0) target = $region25
    $region24: #{tpu_custom_call.1} parent=1 // pred_region
      %163 = vsyncadd [#allocation4], 0
      %s165 = sshll.u32 [#allocation5], 4
      %s166 = int_to_ptr.vmem [resolvable:$true] %s165
      %s167 = sshll.u32 %s4, 4
      %s168 = int_to_ptr.hbm [resolvable:$true] %s167
      %170 = dma.vmem_to_hbm [thread:$0]  %s166, 128, %s168, [#allocation4]
    $region25: #{tpu_custom_call.1} parent=1 // pred_fallthru
      _
    // Predicated region
    $region26: #{tpu_custom_call.1} parent=1 // pred_check
      _
    $region27: #{tpu_custom_call.1} parent=1 // pred_check_branch
      %172 = sbr.rel (0) target = $region29
    $region28: #{tpu_custom_call.1} parent=1 // pred_region
      %174 = dma.done [#allocation4], 128
    $region29: #{tpu_custom_call.1} parent=1 // pred_fallthru
      _
    %175 = vsyncpa [#allocation3], 1
    %176 = vsyncpa [#allocation4], 1

</llo_original>
